<compile_context>
chip_gen: v5e
topology: v5e:2x2
jax: 0.10.0
libtpu: 0.0.40
codegen_flags: <defaults>
</compile_context>

<pallas_src>
import functools

import jax
import jax.numpy as jnp
from jax.experimental import pallas as pl
from jax.experimental.pallas import tpu as pltpu


def _round_up(x, m):
    return ((x + m - 1) // m) * m


def _vmem_capacity_bytes():
    try:
        return int(pltpu.get_tpu_info().vmem_capacity_bytes)
    except Exception:
        return 64 * 1024 * 1024  # conservative fallback (v7x per-TC VMEM)


def _fc_kernel(x_ref, w_ref, b_ref, o_ref):
    # Canonical (tile_n, d) @ (d, tile_c) contraction -> MXU, f32 accumulation.
    y = jnp.dot(x_ref[...], w_ref[...], preferred_element_type=jnp.float32)
    o_ref[...] = (y + b_ref[...]).astype(o_ref.dtype)


@functools.partial(jax.jit, static_argnames=("tile_n", "tile_c"))
def _fc_forward(x, w_t, b, *, tile_n, tile_c):
    n_pad, d = x.shape
    c_pad = w_t.shape[1]
    grid_c = c_pad // tile_c
    grid_n = n_pad // tile_n

    cost = pl.CostEstimate(
        flops=2 * n_pad * c_pad * d,
        transcendentals=0,
        bytes_accessed=(x.size * x.dtype.itemsize * grid_c     # x re-read once per C tile
                        + w_t.size * w_t.dtype.itemsize        # W streamed once total
                        + b.size * b.dtype.itemsize * grid_n
                        + n_pad * c_pad * 4),                  # f32 output writeback
    )

    # Double-buffered working set (x, W^T, out, bias tiles).
    foot = 2 * (tile_n * d * x.dtype.itemsize
                + d * tile_c * w_t.dtype.itemsize
                + tile_n * tile_c * 4
                + tile_c * 4)
    vmem_limit = int(max(32 * 1024 * 1024, min(2 * foot, 96 * 1024 * 1024)))

    return pl.pallas_call(
        _fc_kernel,
        out_shape=jax.ShapeDtypeStruct((n_pad, c_pad), jnp.float32),
        grid_spec=pltpu.PrefetchScalarGridSpec(
            num_scalar_prefetch=0,
            # N innermost: the W^T / bias tiles stay resident in VMEM across N steps
            # while x and the output stream (double-buffered by BlockSpec).
            grid=(grid_c, grid_n),
            in_specs=[
                pl.BlockSpec((tile_n, d), lambda c, n: (n, 0)),   # x
                pl.BlockSpec((d, tile_c), lambda c, n: (0, c)),   # W^T (resident over N)
                pl.BlockSpec((1, tile_c), lambda c, n: (0, c)),   # bias
            ],
            out_specs=pl.BlockSpec((tile_n, tile_c), lambda c, n: (n, c)),
        ),
        compiler_params=pltpu.CompilerParams(
            dimension_semantics=("parallel", "parallel"),
            vmem_limit_bytes=vmem_limit,
        ),
        cost_estimate=cost,
    )(x, w_t, b)


class FeatClassifierPallas:
    """JAX/Pallas equivalent of the PyTorch feat_classifier module."""

    TILE_N_MAX = 512
    TILE_C_CANDIDATES = (2048, 1024, 512, 256, 128)

    def __init__(self, class_num, bottleneck_dim=256, type="linear", key=None,
                 use_bf16=True):
        self.type = type
        class_num = int(class_num)
        bottleneck_dim = int(bottleneck_dim)
        self.class_num = class_num
        self.bottleneck_dim = bottleneck_dim
        self.use_bf16 = use_bf16
        self._sub = 16 if use_bf16 else 8          # bf16 packs 2 rows / sublane

        if key is None:
            key = jax.random.PRNGKey(42)
        kw, kb = jax.random.split(key)

        # Deterministic init mimicking nn.Linear default (uniform in +-1/sqrt(fan_in)).
        bound = 1.0 / (bottleneck_dim ** 0.5)
        v = jax.random.uniform(kw, (class_num, bottleneck_dim), jnp.float32,
                               minval=-bound, maxval=bound)
        b = jax.random.uniform(kb, (class_num,), jnp.float32,
                               minval=-bound, maxval=bound)

        if type == "wn":
            # weight_norm(name='weight', dim=0): v = original weight, g init = ||v|| per row.
            self.v = v
            self.g = jnp.sqrt(jnp.sum(v * v, axis=1, keepdims=True))   # (C, 1)
            self.b = b
            # Fold the wn scale into the weight ONCE at init, in f32, BEFORE any bf16 cast.
            w_eff = v * (self.g * jax.lax.rsqrt(jnp.sum(v * v, axis=1, keepdims=True)))
        else:
            self.w = v
            self.b = b
            w_eff = v

        # --- pick tile_c from a VMEM budget; pad C once (lane-dense); pre-transpose W ---
        op_isz = 2 if use_bf16 else 4
        budget = min(_vmem_capacity_bytes() // 3, 40 * 1024 * 1024)
        c_pad = _round_up(class_num, 128)
        tile_c = 128
        for cand in self.TILE_C_CANDIDATES:
            if cand > c_pad:
                continue
            foot = 2 * (self.TILE_N_MAX * bottleneck_dim * op_isz      # x tile
                        + bottleneck_dim * cand * op_isz               # W^T tile
                        + self.TILE_N_MAX * cand * 4                   # out tile (f32)
                        + cand * 4)                                    # bias tile
            if foot <= budget:
                tile_c = cand
                break
        c_pad = _round_up(c_pad, tile_c)
        self._tile_c = tile_c
        self._c_pad = c_pad
        self._grid_c = c_pad // tile_c

        w_t = jnp.zeros((bottleneck_dim, c_pad), jnp.float32).at[:, :class_num].set(w_eff.T)
        self._w_t = w_t.astype(jnp.bfloat16) if use_bf16 else w_t
        self._b_pad = jnp.zeros((1, c_pad), jnp.float32).at[0, :class_num].set(b)
        self._x_dtype = jnp.bfloat16 if use_bf16 else jnp.float32

    def __call__(self, x):
        n, d = x.shape
        assert d == self.bottleneck_dim

        sub = self._sub
        n_pad = _round_up(n, sub)
        tile_n = min(n_pad, self.TILE_N_MAX)
        n_pad = _round_up(n_pad, tile_n)
        # v7x: if the grid would be 1x1, split N so both TensorCores get a tile.
        if self._grid_c == 1 and n_pad // tile_n == 1 and n_pad >= 2 * sub:
            n_pad = _round_up(n_pad, 2 * sub)
            tile_n = n_pad // 2

        x = x.astype(self._x_dtype)
        if n_pad == n:
            x_p = x                                   # fast path: no pad copy
        else:
            x_p = jnp.zeros((n_pad, d), self._x_dtype).at[:n].set(x)

        y = _fc_forward(x_p, self._w_t, self._b_pad,
                        tile_n=tile_n, tile_c=self._tile_c)

        if n_pad == n and self._c_pad == self.class_num:
            return y                                  # fast path: no slice copy
        return y[:n, :self.class_num]


if __name__ == "__main__":
    key = jax.random.PRNGKey(0)
    kx, kp1, kp2 = jax.random.split(key, 3)

    batch = 8
    bottleneck_dim = 32
    class_num = 16

    x = jax.random.normal(kx, (batch, bottleneck_dim), jnp.float32)

    # --- type='linear', f32 operands ---
    clf_lin = FeatClassifierPallas(class_num, bottleneck_dim, type="linear", key=kp1,
                                   use_bf16=False)
    y_lin = jax.block_until_ready(clf_lin(x))
    y_lin_ref = x @ clf_lin.w.T + clf_lin.b
    assert y_lin.shape == (batch, class_num)
    assert jnp.allclose(y_lin, y_lin_ref, atol=1e-5, rtol=1e-5)

    # --- type='wn', f32 operands ---
    clf_wn = FeatClassifierPallas(class_num, bottleneck_dim, type="wn", key=kp2,
                                  use_bf16=False)
    y_wn = jax.block_until_ready(clf_wn(x))
    w_eff = clf_wn.g * clf_wn.v / jnp.sqrt(jnp.sum(clf_wn.v ** 2, axis=1, keepdims=True))
    y_wn_ref = x @ w_eff.T + clf_wn.b
    assert y_wn.shape == (batch, class_num)
    assert jnp.allclose(y_wn, y_wn_ref, atol=1e-5, rtol=1e-5)

    # --- default bf16-operand path (f32 accumulation + f32 bias), looser tolerance ---
    clf_bf = FeatClassifierPallas(class_num, bottleneck_dim, type="linear", key=kp1)
    y_bf = jax.block_until_ready(clf_bf(x))
    assert y_bf.shape == (batch, class_num)
    assert jnp.allclose(y_bf, y_lin_ref, atol=5e-2, rtol=5e-2)

    print("KERNEL_OK")
</pallas_src>

<mosaic_0001>
module attributes {stable_mosaic.version = 11 : i64} {
  func.func @_fc_kernel(%arg0: i32, %arg1: i32, %arg2: memref<8x32xf32, #tpu.memory_space<vmem>>, %arg3: memref<32x128xf32, #tpu.memory_space<vmem>>, %arg4: memref<1x128xf32, #tpu.memory_space<vmem>>, %arg5: memref<8x128xf32, #tpu.memory_space<vmem>>) attributes {dimension_semantics = [#tpu.dimension_semantics<parallel>, #tpu.dimension_semantics<parallel>], iteration_bounds = array<i64: 1, 1>, scalar_prefetch = 0 : i64, scratch_operands = 0 : i64, tpu.core_type = #tpu.core_type<tc>, window_params = [{transform_indices = @transform_0, window_bounds = array<i64: 8, 32>}, {transform_indices = @transform_1, window_bounds = array<i64: 32, 128>}, {transform_indices = @transform_2, window_bounds = array<i64: 1, 128>}, {transform_indices = @transform_3, window_bounds = array<i64: 8, 128>}]} {
    %c0 = arith.constant 0 : index
    %c0_0 = arith.constant 0 : index
    %0 = vector.load %arg2[%c0, %c0_0] : memref<8x32xf32, #tpu.memory_space<vmem>>, vector<8x32xf32>
    %c0_1 = arith.constant 0 : index
    %c0_2 = arith.constant 0 : index
    %1 = vector.load %arg3[%c0_1, %c0_2] : memref<32x128xf32, #tpu.memory_space<vmem>>, vector<32x128xf32>
    %cst = arith.constant dense<0.000000e+00> : vector<8x128xf32>
    %2 = tpu.matmul %0, %1, %cst {dimension_numbers = #tpu.dot_dimension_numbers<[1], [0], [0], [1], [0, 0, 1, 1], [], []>} : vector<8x32xf32>, vector<32x128xf32>, vector<8x128xf32> -> vector<8x128xf32>
    %c0_3 = arith.constant 0 : index
    %c0_4 = arith.constant 0 : index
    %3 = vector.load %arg4[%c0_3, %c0_4] : memref<1x128xf32, #tpu.memory_space<vmem>>, vector<1x128xf32>
    %4 = vector.broadcast %3 : vector<1x128xf32> to vector<8x128xf32>
    %5 = arith.addf %2, %4 : vector<8x128xf32>
    %c0_5 = arith.constant 0 : index
    %c0_6 = arith.constant 0 : index
    %6 = vector.load %arg5[%c0_5, %c0_6] : memref<8x128xf32, #tpu.memory_space<vmem>>, vector<8x128xf32>
    tpu.vector_store %arg5[%c0_5, %c0_6], %5 {strides = array<i32>} : memref<8x128xf32, #tpu.memory_space<vmem>>, vector<8x128xf32>,
    return
  }
  func.func @transform_0(%arg0: i32, %arg1: i32) -> (i32, i32) {
    %c0_i32 = arith.constant 0 : i32
    %c0_i32_0 = arith.constant 0 : i32
    return %arg1, %c0_i32 : i32, i32
  }
  func.func @transform_1(%arg0: i32, %arg1: i32) -> (i32, i32) {
    %c0_i32 = arith.constant 0 : i32
    %c0_i32_0 = arith.constant 0 : i32
    return %c0_i32, %arg0 : i32, i32
  }
  func.func @transform_2(%arg0: i32, %arg1: i32) -> (i32, i32) {
    %c0_i32 = arith.constant 0 : i32
    %c0_i32_0 = arith.constant 0 : i32
    return %c0_i32, %arg0 : i32, i32
  }
  func.func @transform_3(%arg0: i32, %arg1: i32) -> (i32, i32) {
    %c0_i32 = arith.constant 0 : i32
    return %arg1, %arg0 : i32, i32
  }
}

</mosaic_0001>

<llo_original>
// kernel: _fc_forward.1
$region0: #{_fc_forward.1}
  #allocation0 [shape = 'u32[]', space=smem, size = 0x4, offset = 0x4, fixed_abs, tag = 'smem constant byte address 0x4 - core index']
  #allocation1 [shape = 'u32[72,128]{1,0:T(1,128)}', space=vmem, size = 0x9000, scoped, tag = 'internal scratch']
  %s0 = inlined_call_operand.hbm [shape: f32[8,32], index: 0, kind: input, shape index: {}]
  %s1 = inlined_call_operand.hbm [shape: f32[32,128], index: 1, kind: input, shape index: {}]
  %s2 = inlined_call_operand.vmem [shape: f32[1,128], index: 2, kind: input, shape index: {}]
  %s3 = inlined_call_operand.hbm [shape: f32[8,128], index: 3, kind: output, shape index: {}]
  %s4 = sld [smem:[#allocation0]]
  $region30: #{_fc_forward.1} parent=0
    _
  %s6 = ssub.s32 1, %s4
  %s7 = scalar_select 0, %s6, %s4
  $region1: #{_fc_forward.1} parent=0
    #allocation2 [shape = 'u8[4096]{0}', space=vmem, size = 0x1000, scoped, tag = 'input window, operand 0, single buffered']
    #allocation3 [shape = 's32[1]{0}', space=sflag, size = 0x4, scoped, tag = 'scoped memory for _fc_forward.1']
    #allocation4 [shape = 's32[1]{0}', space=sflag, size = 0x4, scoped, tag = 'scoped memory for _fc_forward.1']
    #allocation5 [shape = 'u8[16384]{0}', space=vmem, size = 0x4000, scoped, tag = 'input window, operand 1, single buffered']
    #allocation6 [shape = 's32[1]{0}', space=sflag, size = 0x4, scoped, tag = 'scoped memory for _fc_forward.1']
    #allocation7 [shape = 'u8[4096]{0}', space=vmem, size = 0x1000, scoped, tag = 'output window, operand 0, single buffered']
    %8 = vsyncpa [#allocation3], 0
    %9 = vsyncpa [#allocation6], 0
    %10 = vsyncpa [#allocation4], 0
    // Predicated region
    $region2: #{_fc_forward.1} parent=1 // pred_check
      _
    $region3: #{_fc_forward.1} parent=1 // pred_check_branch
      %12 = sbr.rel (0) target = $region5
    $region4: #{_fc_forward.1} parent=1 // pred_region
      %14 = vsyncadd [#allocation3], 0
      %s16 = sshll.u32 %s0, 4
      %s17 = int_to_ptr.hbm [resolvable:$true] %s16
      %s18 = sshll.u32 [#allocation2], 4
      %s19 = int_to_ptr.vmem [resolvable:$true] %s18
      %21 = dma.hbm_to_vmem [thread:$0]  %s17, 128, %s19, [#allocation3]
    $region5: #{_fc_forward.1} parent=1 // pred_fallthru
      _
    // Predicated region
    $region6: #{_fc_forward.1} parent=1 // pred_check
      _
    $region7: #{_fc_forward.1} parent=1 // pred_check_branch
      %23 = sbr.rel (0) target = $region9
    $region8: #{_fc_forward.1} parent=1 // pred_region
      %25 = vsyncadd [#allocation6], 0
      %s26 = sshll.u32 %s1, 4
      %s27 = int_to_ptr.hbm [resolvable:$true] %s26
      %s28 = sshll.u32 [#allocation5], 4
      %s29 = int_to_ptr.vmem [resolvable:$true] %s28
      %34 = dma.hbm_to_vmem [thread:$0]  %s27, 512, %s29, [#allocation6], 128, 128, 8
    $region9: #{_fc_forward.1} parent=1 // pred_fallthru
      _
    // Predicated region
    $region10: #{_fc_forward.1} parent=1 // pred_check
      _
    $region11: #{_fc_forward.1} parent=1 // pred_check_branch
      %36 = sbr.rel (0) target = $region13
    $region12: #{_fc_forward.1} parent=1 // pred_region
      _
    $region13: #{_fc_forward.1} parent=1 // pred_fallthru
      _
    // Predicated region
    $region14: #{_fc_forward.1} parent=1 // pred_check
      _
    $region15: #{_fc_forward.1} parent=1 // pred_check_branch
      %38 = sbr.rel (0) target = $region17
    $region16: #{_fc_forward.1} parent=1 // pred_region
      %40 = dma.done [#allocation3], 128
    $region17: #{_fc_forward.1} parent=1 // pred_fallthru
      _
    // Predicated region
    $region18: #{_fc_forward.1} parent=1 // pred_check
      _
    $region19: #{_fc_forward.1} parent=1 // pred_check_branch
      %42 = sbr.rel (0) target = $region21
    $region20: #{_fc_forward.1} parent=1 // pred_region
      %44 = dma.done [#allocation6], 512
    $region21: #{_fc_forward.1} parent=1 // pred_fallthru
      _
    %v45 = vld [vmem:[#allocation2] sm:$0xff]
    %v46 = vld [vmem:[#allocation5] sm:$0xff]
    %v47 = vld [vmem:[#allocation5 + $0x8] sm:$0xff]
    %v48 = vld [vmem:[#allocation5 + $0x10] sm:$0xff]
    %v49 = vld [vmem:[#allocation5 + $0x18] sm:$0xff]
    %v50 = vld [vmem:[%s2] sm:$0x1]
    %v52 = vperm.slane %v50, 0
    %vm54 = vcmask 261120
    %v56 = vsel %vm54, %v45, 0
    %58 = vmatpush.msra.mxu0 0.0
    %59 = vmatpush.msra.mxu0 0.0
    %60 = vmatpush.msra.mxu0 0.0
    %61 = vmatpush.msra.mxu0 0.0
    %62 = vmatpush.msra.mxu0 0.0
    %63 = vmatpush.msra.mxu0 0.0
    %64 = vmatpush.msra.mxu0 0.0
    %65 = vmatpush.msra.mxu0 0.0
    %66 = vmatpush.msra.mxu0 0.0
    %67 = vmatpush.msra.mxu0 0.0
    %68 = vmatpush.msra.mxu0 0.0
    %69 = vmatpush.msra.mxu0 0.0
    %70 = vmatpush.msra.mxu0 %v49
    %71 = vmatpush.msra.mxu0 %v48
    %72 = vmatpush.msra.mxu0 %v47
    %73 = vmatpush.msra.mxu0 %v46
    %74 = vmatmul.f32.gmra.mxu0 %v56
    %v75 = vpop.f32.mrf.mxu0
    %v76 = vadd.f32 %v52, %v75
    %77 = vdwg.mxu0
    %78 = vst [vmem:[#allocation7] sm:$0xff] %v76
    // Predicated region
    $region22: #{_fc_forward.1} parent=1 // pred_check
      _
    $region23: #{_fc_forward.1} parent=1 // pred_check_branch
      %80 = sbr.rel (0) target = $region25
    $region24: #{_fc_forward.1} parent=1 // pred_region
      %82 = vsyncadd [#allocation4], 0
      %s84 = sshll.u32 [#allocation7], 4
      %s85 = int_to_ptr.vmem [resolvable:$true] %s84
      %s86 = sshll.u32 %s3, 4
      %s87 = int_to_ptr.hbm [resolvable:$true] %s86
      %89 = dma.vmem_to_hbm [thread:$0]  %s85, 128, %s87, [#allocation4]
    $region25: #{_fc_forward.1} parent=1 // pred_fallthru
      _
    // Predicated region
    $region26: #{_fc_forward.1} parent=1 // pred_check
      _
    $region27: #{_fc_forward.1} parent=1 // pred_check_branch
      %91 = sbr.rel (0) target = $region29
    $region28: #{_fc_forward.1} parent=1 // pred_region
      %93 = dma.done [#allocation4], 128
    $region29: #{_fc_forward.1} parent=1 // pred_fallthru
      _
    %94 = vsyncpa [#allocation3], 1
    %95 = vsyncpa [#allocation6], 1
    %96 = vsyncpa [#allocation4], 1

</llo_original>
